<compile_context>
chip_gen: v6e
topology: v6e:2x2x1
jax: 0.10.0
libtpu: 0.0.40
codegen_flags: <defaults>
</compile_context>

<pallas_src>
import functools

import jax
import jax.numpy as jnp
from jax.experimental import pallas as pl
from jax.experimental.pallas import tpu as pltpu


def _conv_relu_kernel(x_ref, w_ref, b_ref, o_ref, xpad_ref, *, H, W, Cin, K, p):
    # x_ref   : (1, H, W*Cin)        unpadded input for one batch element,
    #                                channels packed with width into lanes
    # w_ref   : (K, Wp*Cin, W*Cout)  banded conv weight (kw & cin folded into
    #                                the contraction dim)
    # b_ref   : (1, W*Cout)          bias tiled over W (f32)
    # o_ref   : (1, H, W*Cout)       lane-dense conv(+bias)+ReLU output
    # xpad_ref: (Hp, Wp*Cin)         VMEM scratch holding the zero-padded input
    wc_out = o_ref.shape[-1]                      # W * Cout (static)

    # In-kernel 'same' zero-padding (replaces the wrapper-side jnp.pad, so the
    # padded copy never round-trips through HBM).
    xpad_ref[...] = jnp.zeros_like(xpad_ref)
    xpad_ref[p:p + H, p * Cin:p * Cin + W * Cin] = x_ref[0]

    acc = jnp.zeros((H, wc_out), dtype=jnp.float32)
    # K matmuls with contraction depth Wp*Cin instead of K*K dots with
    # contraction Cin; each row slice is a pure sublane shift (no reshape /
    # lane relayout per tap).
    for kh in range(K):                            # K is tiny -> static unroll
        acc = acc + jnp.dot(xpad_ref[kh:kh + H, :], w_ref[kh],
                            preferred_element_type=jnp.float32)

    acc = acc + b_ref[...]                         # f32 epilogue (no bf16 VPU on v5e)
    acc = jnp.maximum(acc, 0.0)                    # ReLU commutes with pixel shuffle
    o_ref[...] = acc[None].astype(o_ref.dtype)     # lane-dense (1, H, W*Cout) store


def _build_banded_weight(w_hwio, W):
    """Fold (kw, cin) into the matmul contraction: (K, K, Cin, Cout) -> (K, Wp*Cin, W*Cout).

    wb[kh, (w+kw)*Cin + ci, w*Cout + co] = w_hwio[kh, kw, ci, co]
    so that  (padded_rows[kh] @ wb[kh]) summed over kh  ==  same-padded conv.
    """
    K, _, Cin, Cout = w_hwio.shape
    p = K // 2
    Wp = W + 2 * p
    eye = jnp.eye(W, dtype=w_hwio.dtype)
    wb = jnp.zeros((K, Wp * Cin, W * Cout), dtype=w_hwio.dtype)
    for kh in range(K):
        for kw in range(K):
            blk = jnp.kron(eye, w_hwio[kh, kw])        # (W*Cin, W*Cout) block-diagonal
            wb = wb.at[kh, kw * Cin:kw * Cin + W * Cin, :].add(blk)
    return wb


def upsampler_forward(x_nchw, weight_hwio, bias, *, channel, kernel_size, scale,
                      compute_dtype=jnp.float32):
    """conv(kernel_size, 'same') + bias -> PixelShuffle(scale) -> ReLU, NCHW in/out."""
    B, Cin, H, W = x_nchw.shape
    K = kernel_size
    assert K % 2 == 1, "padding = K//2 only matches 'same' conv for odd kernel_size"
    p = K // 2
    Wp = W + 2 * p
    Cout = channel * scale * scale

    # NCHW -> NHWC -> (B, H, W*Cin): pack channels with width onto the lane axis
    # (64 useful lanes instead of 4); single fused XLA copy.
    x2d = jnp.transpose(x_nchw, (0, 2, 3, 1)).reshape(B, H, W * Cin)

    wb = _build_banded_weight(weight_hwio, W)              # (K, Wp*Cin, W*Cout)
    bias_lanes = jnp.tile(bias, W).reshape(1, W * Cout)    # stays f32 for the epilogue

    # On v6e/v7x with non-toy shapes pass compute_dtype=jnp.bfloat16 (halves HBM
    # traffic, native MXU path); accumulation stays f32 inside the kernel.
    if compute_dtype != x2d.dtype:
        x2d = x2d.astype(compute_dtype)
        wb = wb.astype(compute_dtype)

    # NOTE: this banded-weight packing targets small channel counts / moderate W
    # (weight is O(W^2 * Cin * Cout)).  For production channel counts (>=128) a
    # plain im2col matmul with an H-tiled grid (with (K-1)-row halo, tile sized
    # for 64 MiB VMEM on v7x) is the right variant.
    kernel = functools.partial(_conv_relu_kernel, H=H, W=W, Cin=Cin, K=K, p=p)
    y = pl.pallas_call(
        kernel,
        out_shape=jax.ShapeDtypeStruct((B, H, W * Cout), x_nchw.dtype),
        grid_spec=pltpu.PrefetchScalarGridSpec(
            num_scalar_prefetch=0,
            grid=(B,),
            in_specs=[
                pl.BlockSpec((1, H, W * Cin), lambda b: (b, 0, 0)),
                pl.BlockSpec((K, Wp * Cin, W * Cout), lambda b: (0, 0, 0)),
                pl.BlockSpec((1, W * Cout), lambda b: (0, 0)),
            ],
            out_specs=pl.BlockSpec((1, H, W * Cout), lambda b: (b, 0, 0)),
            scratch_shapes=[pltpu.VMEM((H + 2 * p, Wp * Cin), compute_dtype)],
        ),
        compiler_params=pltpu.CompilerParams(
            dimension_semantics=("parallel",),      # both TCs busy on v7x
            vmem_limit_bytes=32 * 1024 * 1024,
        ),
    )(x2d, wb, bias_lanes)

    # (B, H, W*Cout) -> pixel shuffle -> NCHW.  First reshape is contiguous
    # (free); the shuffle is one small fused XLA transpose.
    y = y.reshape(B, H, W, channel, scale, scale)
    y = jnp.transpose(y, (0, 3, 1, 4, 2, 5))               # (B, C, H, r, W, r)
    return y.reshape(B, channel, H * scale, W * scale)


class UpsamplerPallas:
    """JAX/Pallas equivalent of the PyTorch Upsampler module (NCHW in/out)."""

    def __init__(self, channel, kernel_size, scale, key, compute_dtype=jnp.float32):
        assert kernel_size % 2 == 1, "kernel_size must be odd for K//2 'same' padding"
        self.channel = channel
        self.kernel_size = kernel_size
        self.scale = scale
        cout = channel * scale * scale
        # Deterministic init mirroring _conv.__init__: N(0, 0.02) weight, zero bias.
        # torch weight layout (Cout, Cin, K, K) -> HWIO (K, K, Cin, Cout).
        w_oihw = 0.02 * jax.random.normal(
            key, (cout, channel, kernel_size, kernel_size), dtype=jnp.float32)
        self.weight_hwio = jnp.transpose(w_oihw, (2, 3, 1, 0))
        self.bias = jnp.zeros((cout,), dtype=jnp.float32)
        self._forward = jax.jit(functools.partial(
            upsampler_forward, channel=channel, kernel_size=kernel_size,
            scale=scale, compute_dtype=compute_dtype))

    def __call__(self, x_nchw):
        return self._forward(x_nchw, self.weight_hwio, self.bias)


def _reference_upsampler(x_nchw, w_oihw, bias, kernel_size, channel, scale):
    """Pure-JAX reference: conv('same') + bias -> PixelShuffle -> ReLU."""
    p = kernel_size // 2
    y = jax.lax.conv_general_dilated(
        x_nchw, w_oihw, window_strides=(1, 1), padding=((p, p), (p, p)),
        dimension_numbers=("NCHW", "OIHW", "NCHW"),
        precision=jax.lax.Precision.HIGHEST,
        preferred_element_type=jnp.float32)
    y = y + bias[None, :, None, None]
    B, _, H, W = y.shape
    r = scale
    y = y.reshape(B, channel, r, r, H, W)
    y = jnp.transpose(y, (0, 1, 4, 2, 5, 3))               # (B, C, H, r, W, r)
    y = y.reshape(B, channel, H * r, W * r)
    return jnp.maximum(y, 0.0)


if __name__ == "__main__":
    key = jax.random.PRNGKey(0)
    k_x, k_w = jax.random.split(key)

    B, C, H, W = 2, 4, 16, 16
    kernel_size, scale = 3, 2

    x = jax.random.normal(k_x, (B, C, H, W), dtype=jnp.float32)

    model = UpsamplerPallas(channel=C, kernel_size=kernel_size, scale=scale,
                            key=k_w)
    out = jax.block_until_ready(model(x))

    assert out.shape == (B, C, H * scale, W * scale), out.shape
    assert bool(jnp.all(out >= 0.0))  # ReLU applied

    # Numerical check against a pure-JAX reference.
    w_oihw = jnp.transpose(model.weight_hwio, (3, 2, 0, 1))
    ref = _reference_upsampler(x, w_oihw, model.bias, kernel_size, C, scale)
    max_err = float(jnp.max(jnp.abs(out - ref)))
    assert jnp.allclose(out, ref, atol=1e-3, rtol=1e-3), max_err

    print("KERNEL_OK")
</pallas_src>

<mosaic_0001>
module attributes {stable_mosaic.version = 11 : i64} {
  func.func @_conv_relu_kernel(%arg0: i32, %arg1: memref<1x16x64xf32, #tpu.memory_space<vmem>>, %arg2: memref<3x72x256xf32, #tpu.memory_space<vmem>>, %arg3: memref<1x256xf32, #tpu.memory_space<vmem>>, %arg4: memref<1x16x256xf32, #tpu.memory_space<vmem>>, %arg5: memref<18x72xf32, #tpu.memory_space<vmem>>) attributes {dimension_semantics = [#tpu.dimension_semantics<parallel>], iteration_bounds = array<i64: 2>, scalar_prefetch = 0 : i64, scratch_operands = 1 : i64, tpu.core_type = #tpu.core_type<tc>, window_params = [{transform_indices = @transform_0, window_bounds = array<i64: 1, 16, 64>}, {pipeline_mode = #tpu.pipeline_mode<synchronous>, transform_indices = @transform_1, window_bounds = array<i64: 3, 72, 256>}, {pipeline_mode = #tpu.pipeline_mode<synchronous>, transform_indices = @transform_2, window_bounds = array<i64: 1, 256>}, {transform_indices = @transform_3, window_bounds = array<i64: 1, 16, 256>}]} {
    %cst = arith.constant 0.000000e+00 : f32
    %0 = vector.broadcast %cst : f32 to vector<18x72xf32>
    %c0 = arith.constant 0 : index
    %c0_0 = arith.constant 0 : index
    %1 = vector.load %arg5[%c0, %c0_0] : memref<18x72xf32, #tpu.memory_space<vmem>>, vector<18x72xf32>
    tpu.vector_store %arg5[%c0, %c0_0], %0 {strides = array<i32>} : memref<18x72xf32, #tpu.memory_space<vmem>>, vector<18x72xf32>,
    %c0_1 = arith.constant 0 : index
    %c0_2 = arith.constant 0 : index
    %c0_3 = arith.constant 0 : index
    %2 = vector.load %arg1[%c0_1, %c0_2, %c0_3] : memref<1x16x64xf32, #tpu.memory_space<vmem>>, vector<1x16x64xf32>
    %3 = vector.shape_cast %2 : vector<1x16x64xf32> to vector<16x64xf32>
    %c1 = arith.constant 1 : index
    %c4 = arith.constant 4 : index
    %4 = vector.load %arg5[%c1, %c4] : memref<18x72xf32, #tpu.memory_space<vmem>>, vector<16x64xf32>
    tpu.vector_store %arg5[%c1, %c4], %3 {strides = array<i32>} : memref<18x72xf32, #tpu.memory_space<vmem>>, vector<16x64xf32>,
    %cst_4 = arith.constant 0.000000e+00 : f32
    %5 = vector.broadcast %cst_4 : f32 to vector<16x256xf32>
    %c0_5 = arith.constant 0 : index
    %c0_6 = arith.constant 0 : index
    %6 = vector.load %arg5[%c0_5, %c0_6] : memref<18x72xf32, #tpu.memory_space<vmem>>, vector<16x72xf32>
    %c0_7 = arith.constant 0 : index
    %c0_8 = arith.constant 0 : index
    %c0_9 = arith.constant 0 : index
    %7 = vector.load %arg2[%c0_7, %c0_8, %c0_9] : memref<3x72x256xf32, #tpu.memory_space<vmem>>, vector<1x72x256xf32>
    %8 = vector.shape_cast %7 : vector<1x72x256xf32> to vector<72x256xf32>
    %cst_10 = arith.constant dense<0.000000e+00> : vector<16x256xf32>
    %9 = tpu.matmul %6, %8, %cst_10 {dimension_numbers = #tpu.dot_dimension_numbers<[1], [0], [0], [1], [0, 0, 1, 1], [], []>} : vector<16x72xf32>, vector<72x256xf32>, vector<16x256xf32> -> vector<16x256xf32>
    %10 = arith.addf %5, %9 : vector<16x256xf32>
    %c1_11 = arith.constant 1 : index
    %c0_12 = arith.constant 0 : index
    %11 = vector.load %arg5[%c1_11, %c0_12] : memref<18x72xf32, #tpu.memory_space<vmem>>, vector<16x72xf32>
    %c1_13 = arith.constant 1 : index
    %c0_14 = arith.constant 0 : index
    %c0_15 = arith.constant 0 : index
    %12 = vector.load %arg2[%c1_13, %c0_14, %c0_15] : memref<3x72x256xf32, #tpu.memory_space<vmem>>, vector<1x72x256xf32>
    %13 = vector.shape_cast %12 : vector<1x72x256xf32> to vector<72x256xf32>
    %cst_16 = arith.constant dense<0.000000e+00> : vector<16x256xf32>
    %14 = tpu.matmul %11, %13, %cst_16 {dimension_numbers = #tpu.dot_dimension_numbers<[1], [0], [0], [1], [0, 0, 1, 1], [], []>} : vector<16x72xf32>, vector<72x256xf32>, vector<16x256xf32> -> vector<16x256xf32>
    %15 = arith.addf %10, %14 : vector<16x256xf32>
    %c2 = arith.constant 2 : index
    %c0_17 = arith.constant 0 : index
    %16 = vector.load %arg5[%c2, %c0_17] : memref<18x72xf32, #tpu.memory_space<vmem>>, vector<16x72xf32>
    %c2_18 = arith.constant 2 : index
    %c0_19 = arith.constant 0 : index
    %c0_20 = arith.constant 0 : index
    %17 = vector.load %arg2[%c2_18, %c0_19, %c0_20] : memref<3x72x256xf32, #tpu.memory_space<vmem>>, vector<1x72x256xf32>
    %18 = vector.shape_cast %17 : vector<1x72x256xf32> to vector<72x256xf32>
    %cst_21 = arith.constant dense<0.000000e+00> : vector<16x256xf32>
    %19 = tpu.matmul %16, %18, %cst_21 {dimension_numbers = #tpu.dot_dimension_numbers<[1], [0], [0], [1], [0, 0, 1, 1], [], []>} : vector<16x72xf32>, vector<72x256xf32>, vector<16x256xf32> -> vector<16x256xf32>
    %20 = arith.addf %15, %19 : vector<16x256xf32>
    %c0_22 = arith.constant 0 : index
    %c0_23 = arith.constant 0 : index
    %21 = vector.load %arg3[%c0_22, %c0_23] : memref<1x256xf32, #tpu.memory_space<vmem>>, vector<1x256xf32>
    %22 = vector.broadcast %21 : vector<1x256xf32> to vector<16x256xf32>
    %23 = arith.addf %20, %22 : vector<16x256xf32>
    %cst_24 = arith.constant 0.000000e+00 : f32
    %24 = vector.broadcast %cst_24 : f32 to vector<16x256xf32>
    %25 = arith.maximumf %23, %24 : vector<16x256xf32>
    %26 = vector.shape_cast %25 : vector<16x256xf32> to vector<1x16x256xf32>
    %c0_25 = arith.constant 0 : index
    %c0_26 = arith.constant 0 : index
    %c0_27 = arith.constant 0 : index
    %27 = vector.load %arg4[%c0_25, %c0_26, %c0_27] : memref<1x16x256xf32, #tpu.memory_space<vmem>>, vector<1x16x256xf32>
    tpu.vector_store %arg4[%c0_25, %c0_26, %c0_27], %26 {strides = array<i32>} : memref<1x16x256xf32, #tpu.memory_space<vmem>>, vector<1x16x256xf32>,
    return
  }
  func.func @transform_0(%arg0: i32) -> (i32, i32, i32) {
    %c0_i32 = arith.constant 0 : i32
    %c0_i32_0 = arith.constant 0 : i32
    %c0_i32_1 = arith.constant 0 : i32
    return %arg0, %c0_i32, %c0_i32_0 : i32, i32, i32
  }
  func.func @transform_1(%arg0: i32) -> (i32, i32, i32) {
    %c0_i32 = arith.constant 0 : i32
    %c0_i32_0 = arith.constant 0 : i32
    %c0_i32_1 = arith.constant 0 : i32
    %c0_i32_2 = arith.constant 0 : i32
    return %c0_i32, %c0_i32_0, %c0_i32_1 : i32, i32, i32
  }
  func.func @transform_2(%arg0: i32) -> (i32, i32) {
    %c0_i32 = arith.constant 0 : i32
    %c0_i32_0 = arith.constant 0 : i32
    %c0_i32_1 = arith.constant 0 : i32
    return %c0_i32, %c0_i32_0 : i32, i32
  }
  func.func @transform_3(%arg0: i32) -> (i32, i32, i32) {
    %c0_i32 = arith.constant 0 : i32
    %c0_i32_0 = arith.constant 0 : i32
    %c0_i32_1 = arith.constant 0 : i32
    return %arg0, %c0_i32, %c0_i32_0 : i32, i32, i32
  }
}

</mosaic_0001>

<llo_original>
// kernel: tile.8
$region0: #{tile.8}
  #allocation0 [shape = 's32[1]{0}', space=sflag, size = 0x4, scoped, tag = 'scoped memory for tile.8']
  %s0 = inlined_call_operand.vmem [shape: f32[16], index: 0, kind: input, shape index: {}]
  %s1 = inlined_call_operand.vmem [shape: f32[16,16], index: 1, kind: output, shape index: {}]
  // Predicated region
  $region2: #{tile.8} parent=0 // pred_check
    _
  $region3: #{tile.8} parent=0 // pred_check_branch
    %3 = sbr.rel (0) target = $region5
  $region4: #{tile.8} parent=0 // pred_region
    _
  $region5: #{tile.8} parent=0 // pred_fallthru
    _
  %v4 = vld [vmem:[%s0] ss:$0 sm:$0xff]
  %5 = vst [vmem:[%s1] sm:$0xff] %v4
  %s6 = scalar_lea.vmem %s1, 8
  %7 = vst [vmem:[%s6] sm:$0xff] %v4

// kernel: tile.9
$region0: #{tile.9}
  %s0 = inlined_call_operand.vmem [shape: f32[16,16], index: 0, kind: input, shape index: {}]
  %s1 = inlined_call_operand.vmem [shape: f32[1,256], index: 1, kind: output, shape index: {}]
  $region1: #{tile.9} parent=0
    #allocation0 [shape = 'u8[8192]{0}', space=vmem, size = 0x2000, scoped, tag = 'scoped mem for output reshape']
    %s2 = smov 3
    %v3 = vld [vmem:[%s0] ss:$8 sm:%s2]
    %vm4 = vcmask 130048
    %5 = vst.msk [vmem:[#allocation0] ss:$8 sm:$0x3] %vm4, %v3
    %s6 = scalar_lea.vmem %s0, 7
    %s7 = smov 3
    %v8 = vld [vmem:[%s6] ss:$8 sm:%s7]
    %9 = vrot.lane.b32.xlu0 %v8, 112
    %v10 = vpop.permute.xlu0 %9
    %vm11 = vcmask 1048448
    %12 = vst.msk [vmem:[#allocation0] ss:$8 sm:$0x3] %vm11, %v10
    %s13 = scalar_lea.vmem %s0, 6
    %s14 = smov 3
    %v15 = vld [vmem:[%s13] ss:$8 sm:%s14]
    %16 = vrot.lane.b32.xlu0 %v15, 96
    %v17 = vpop.permute.xlu0 %16
    %vm18 = vcmask 917248
    %19 = vst.msk [vmem:[#allocation0] ss:$8 sm:$0x3] %vm18, %v17
    %s20 = scalar_lea.vmem %s0, 5
    %s21 = smov 3
    %v22 = vld [vmem:[%s20] ss:$8 sm:%s21]
    %23 = vrot.lane.b32.xlu0 %v22, 80
    %v24 = vpop.permute.xlu0 %23
    %vm25 = vcmask 786048
    %26 = vst.msk [vmem:[#allocation0] ss:$8 sm:$0x3] %vm25, %v24
    %s27 = scalar_lea.vmem %s0, 4
    %s28 = smov 3
    %v29 = vld [vmem:[%s27] ss:$8 sm:%s28]
    %30 = vrot.lane.b32.xlu0 %v29, 64
    %v31 = vpop.permute.xlu0 %30
    %vm32 = vcmask 654848
    %33 = vst.msk [vmem:[#allocation0] ss:$8 sm:$0x3] %vm32, %v31
    %s34 = scalar_lea.vmem %s0, 3
    %s35 = smov 3
    %v36 = vld [vmem:[%s34] ss:$8 sm:%s35]
    %37 = vrot.lane.b32.xlu0 %v36, 48
    %v38 = vpop.permute.xlu0 %37
    %vm39 = vcmask 523648
    %40 = vst.msk [vmem:[#allocation0] ss:$8 sm:$0x3] %vm39, %v38
    %s41 = scalar_lea.vmem %s0, 2
    %s42 = smov 3
    %v43 = vld [vmem:[%s41] ss:$8 sm:%s42]
    %44 = vrot.lane.b32.xlu0 %v43, 32
    %v45 = vpop.permute.xlu0 %44
    %vm46 = vcmask 392448
    %47 = vst.msk [vmem:[#allocation0] ss:$8 sm:$0x3] %vm46, %v45
    %s48 = scalar_lea.vmem %s0, 1
    %s49 = smov 3
    %v50 = vld [vmem:[%s48] ss:$8 sm:%s49]
    %51 = vrot.lane.b32.xlu0 %v50, 16
    %v52 = vpop.permute.xlu0 %51
    %vm53 = vcmask 261248
    %54 = vst.msk [vmem:[#allocation0] ss:$8 sm:$0x3] %vm53, %v52
    %s56 = sshll.u32 1, 1
    %s57 = ssub.s32 %s56, 1
    %v59 = vld [vmem:[#allocation0] sm:%s57]
    %s60 = sshll.u32 1, 1
    %s61 = ssub.s32 %s60, 1
    %62 = vst [vmem:[%s1] sm:%s61] %v59
    %s63 = scalar_lea.vmem [#allocation0], 8
    %v64 = vld [vmem:[%s63] sm:%s57]
    %s65 = sshll.u32 1, 1
    %s66 = ssub.s32 %s65, 1
    %s67 = scalar_lea.vmem %s1, 1
    %68 = vst [vmem:[%s67] sm:%s66] %v64

// kernel: upsampler_forward.1
$region0: #{upsampler_forward.1}
  #allocation0 [shape = 'u32[]', space=smem, size = 0x4, offset = 0x4, fixed_abs, tag = 'smem constant byte address 0x4 - core index']
  #allocation1 [shape = 'u32[144,128]{1,0:T(1,128)}', space=vmem, size = 0x12000, scoped, tag = 'internal scratch']
  #allocation2 [shape = 'f32[18,72]{1,0:T(8,128)}', space=vmem, size = 0x3000, scoped, tag = 'scratch operand']
  %s0 = inlined_call_operand.vmem [shape: f32[2,16,64], index: 0, kind: input, shape index: {}]
  %s1 = inlined_call_operand.vmem [shape: f32[3,72,256], index: 1, kind: input, shape index: {}]
  %s2 = inlined_call_operand.vmem [shape: f32[1,256], index: 2, kind: input, shape index: {}]
  %s3 = inlined_call_operand.vmem [shape: f32[2,16,256], index: 3, kind: output, shape index: {}]
  %s4 = sld [smem:[#allocation0]]
  $region45: #{upsampler_forward.1} parent=0
    _
  %s6 = ssub.s32 1, %s4
  %s7 = scalar_select 0, %s6, %s4
  loop: start=0, step=1, limit=4
  $region2: #{upsampler_forward.1} parent=0 // loop_pre_header
    _
  $region3: #{upsampler_forward.1} parent=0 // loop_header
    %s9 = sphi 0, %s13
    %p10 = scmp.ge.s32.totalorder %s9, 4
    %s19 = sphi 0, %s21
    %s22 = sphi 0, %s19
    %s23 = sphi 0, %s22
    %s39 = sphi 0, %s23
    %s43 = sphi 0, %s43
    %s45 = sphi 0, %s43
    %s46 = sphi 0, %s45
    %s60 = sphi 0, %s46
    %s64 = sphi 0, %s64
    %s66 = sphi 0, %s64
    %s67 = sphi 0, %s66
    %s81 = sphi 0, %s67
    %s87 = sphi 0, %s89
    %s90 = sphi 0, %s87
    %s91 = sphi 0, %s90
    %s107 = sphi 0, %s91
  $region4: #{upsampler_forward.1} parent=0 // loop_header_branch
    %12 = sbr.rel (%p10) target = $region8
  $region5: #{upsampler_forward.1} parent=0 // loop_body
    %s14 = ssub.s32 %s9, 1
    %s15 = ssub.s32 %s9, 2
    %s16 = sadd.s32 %s9, 1
    %s17 = ssub.s32 %s9, %s16
    %p18 = scmp.eq.s32.totalorder %s17, 0
    %s20 = sadd.s32 %s19, 1
    %s21 = scalar_select %p18, %s19, %s20
    %p24 = pneg %p18
    %p25 = scmp.eq.s32.totalorder %s9, 1
    %p26 = por %p24, %p25
    %p27 = scmp.ne.s32.totalorder %s19, %s22
    %p28 = scmp.eq.s32.totalorder %s9, 0
    %p29 = por %p27, %p28
    %p30 = scmp.ne.s32.totalorder %s19, %s22
    %p31 = scmp.eq.s32.totalorder %s14, 1
    %p32 = por %p30, %p31
    %p33 = scmp.ne.s32.totalorder %s22, %s23
    %p34 = scmp.eq.s32.totalorder %s14, 0
    %p35 = por %p33, %p34
    %p36 = scmp.ne.s32.totalorder %s22, %s23
    %p37 = scmp.eq.s32.totalorder %s15, 1
    %p38 = por %p36, %p37
    %p40 = scmp.ne.s32.totalorder %s23, %s39
    %p41 = scmp.eq.s32.totalorder %s15, 0
    %p42 = por %p40, %p41
    %s44 = sadd.s32 %s43, 1
    %p47 = scmp.eq.s32.totalorder %s9, 1
    %p48 = scmp.ne.s32.totalorder %s43, %s45
    %p49 = scmp.eq.s32.totalorder %s9, 0
    %p50 = por %p48, %p49
    %p51 = scmp.ne.s32.totalorder %s43, %s45
    %p52 = scmp.eq.s32.totalorder %s14, 1
    %p53 = por %p51, %p52
    %p54 = scmp.ne.s32.totalorder %s45, %s46
    %p55 = scmp.eq.s32.totalorder %s14, 0
    %p56 = por %p54, %p55
    %p57 = scmp.ne.s32.totalorder %s45, %s46
    %p58 = scmp.eq.s32.totalorder %s15, 1
    %p59 = por %p57, %p58
    %p61 = scmp.ne.s32.totalorder %s46, %s60
    %p62 = scmp.eq.s32.totalorder %s15, 0
    %p63 = por %p61, %p62
    %s65 = sadd.s32 %s64, 1
    %p68 = scmp.eq.s32.totalorder %s9, 1
    %p69 = scmp.ne.s32.totalorder %s64, %s66
    %p70 = scmp.eq.s32.totalorder %s9, 0
    %p71 = por %p69, %p70
    %p72 = scmp.ne.s32.totalorder %s64, %s66
    %p73 = scmp.eq.s32.totalorder %s14, 1
    %p74 = por %p72, %p73
    %p75 = scmp.ne.s32.totalorder %s66, %s67
    %p76 = scmp.eq.s32.totalorder %s14, 0
    %p77 = por %p75, %p76
    %p78 = scmp.ne.s32.totalorder %s66, %s67
    %p79 = scmp.eq.s32.totalorder %s15, 1
    %p80 = por %p78, %p79
    %p82 = scmp.ne.s32.totalorder %s67, %s81
    %p83 = scmp.eq.s32.totalorder %s15, 0
    %p84 = por %p82, %p83
    %s85 = ssub.s32 %s9, %s16
    %p86 = scmp.eq.s32.totalorder %s85, 0
    %s88 = sadd.s32 %s87, 1
    %s89 = scalar_select %p86, %s87, %s88
    %p92 = pneg %p86
    %p93 = scmp.eq.s32.totalorder %s9, 1
    %p94 = por %p92, %p93
    %p95 = scmp.ne.s32.totalorder %s87, %s90
    %p96 = scmp.eq.s32.totalorder %s9, 0
    %p97 = por %p95, %p96
    %p98 = scmp.ne.s32.totalorder %s87, %s90
    %p99 = scmp.eq.s32.totalorder %s14, 1
    %p100 = por %p98, %p99
    %p101 = scmp.ne.s32.totalorder %s90, %s91
    %p102 = scmp.eq.s32.totalorder %s14, 0
    %p103 = por %p101, %p102
    %p104 = scmp.ne.s32.totalorder %s90, %s91
    %p105 = scmp.eq.s32.totalorder %s15, 1
    %p106 = por %p104, %p105
    %p108 = scmp.ne.s32.totalorder %s91, %s107
    %p109 = scmp.eq.s32.totalorder %s15, 0
    %p110 = por %p108, %p109
    %p111 = scmp.le.s32.totalorder 1, %s9
    %p112 = scmp.lt.s32.totalorder %s9, 3
    %p113 = pnand %p111, %p112
    %p114 = pneg %p113
    // Predicated region
    $region9: #{upsampler_forward.1} parent=5 // pred_check
      _
    $region10: #{upsampler_forward.1} parent=5 // pred_check_branch
      %116 = sbr.rel (%p113) target = $region12
    $region11: #{upsampler_forward.1} parent=5 // pred_region
      %s117 = ssub.s32 %s9, 1
      // Predicated region
      $region13: #{upsampler_forward.1} parent=11 // pred_check
        %p118 = pneg %p56
      $region14: #{upsampler_forward.1} parent=11 // pred_check_branch
        %120 = sbr.rel (%p118) target = $region16
      $region15: #{upsampler_forward.1} parent=11 // pred_region
        _
      $region16: #{upsampler_forward.1} parent=11 // pred_fallthru
        _
      // Predicated region
      $region17: #{upsampler_forward.1} parent=11 // pred_check
        %p121 = pneg %p77
      $region18: #{upsampler_forward.1} parent=11 // pred_check_branch
        %123 = sbr.rel (%p121) target = $region20
      $region19: #{upsampler_forward.1} parent=11 // pred_region
        _
      $region20: #{upsampler_forward.1} parent=11 // pred_fallthru
        _
    $region12: #{upsampler_forward.1} parent=5 // pred_fallthru
      _
    %p124 = scmp.lt.s32.totalorder %s9, 2
    // Predicated region
    $region21: #{upsampler_forward.1} parent=5 // pred_check
      %p125 = pneg %p124
    $region22: #{upsampler_forward.1} parent=5 // pred_check_branch
      %127 = sbr.rel (%p125) target = $region24
    $region23: #{upsampler_forward.1} parent=5 // pred_region
      // Predicated region
      $region25: #{upsampler_forward.1} parent=23 // pred_check
        %p128 = pneg %p29
      $region26: #{upsampler_forward.1} parent=23 // pred_check_branch
        %130 = sbr.rel (%p128) target = $region28
      $region27: #{upsampler_forward.1} parent=23 // pred_region
        %p131 = scmp.lt.s32.totalorder %s9, 1
        %s132 = scalar_select %p131, %s9, 1
        %s133 = smul.addr %s132, 2
        %s134 = smul.addr %s133, 8
        %s135 = scalar_lea.vmem %s0, %s134
      $region28: #{upsampler_forward.1} parent=23 // pred_fallthru
        _
    $region24: #{upsampler_forward.1} parent=5 // pred_fallthru
      _
    %p136 = scmp.le.s32.totalorder 1, %s9
    %p137 = scmp.lt.s32.totalorder %s9, 3
    %p138 = pnand %p136, %p137
    %p139 = pneg %p138
    // Predicated region
    $region29: #{upsampler_forward.1} parent=5 // pred_check
      _
    $region30: #{upsampler_forward.1} parent=5 // pred_check_branch
      %141 = sbr.rel (%p138) target = $region32
    $region31: #{upsampler_forward.1} parent=5 // pred_region
      %s142 = ssub.s32 %s9, 1
      %p143 = scmp.lt.s32.totalorder %s14, 1
      %s144 = scalar_select %p143, %s14, 1
      %s145 = smul.addr %s144, 2
      %s146 = smul.addr %s145, 8
      %s147 = scalar_lea.vmem %s0, %s146
      %p148 = pneg %p35
      %p149 = pneg %p32
      %p150 = pneg %p56
      %p151 = pneg %p53
      %p152 = pneg %p77
      %p153 = pneg %p74
      %p154 = pneg %p103
      %p155 = pneg %p100
      %p156 = scmp.lt.s32.totalorder %s14, 1
      %s157 = scalar_select %p156, %s14, 1
      %s158 = smul.addr %s157, 4
      %s159 = smul.addr %s158, 8
      %s160 = scalar_lea.vmem %s3, %s159
      %p161 = scmp.lt.s32.totalorder %s14, 1
      %s162 = scalar_select %p161, %s14, 1
      %s163 = smul.addr %s162, 2
      %s164 = smul.addr %s163, 8
      %s165 = scalar_lea.vmem %s0, %s164
      %p166 = scmp.lt.s32.totalorder %s14, 1
      %s167 = scalar_select %p166, %s14, 1
      %s168 = smul.addr %s167, 4
      %s169 = smul.addr %s168, 8
      %s170 = scalar_lea.vmem %s3, %s169
      %vm171 = vcmask 588800
      %172 = vst.msk [vmem:[#allocation2] sm:$0xff] %vm171, 0.0
      %173 = vst.msk [vmem:[#allocation2 + $0x8] sm:$0xff] %vm171, 0.0
      %vm174 = vcmask 582656
      %175 = vst.msk [vmem:[#allocation2 + $0x10] sm:$0x3] %vm174, 0.0
      %v176 = vld [vmem:[%s165] sm:$0xff]
      %v177 = vld [vmem:[%s165 + $0x8] sm:$0xff]
      %180 = vrot.lane.b32.xlu0 %v176, 4
      %v181 = vpop.permute.xlu0 %180
      %182 = vrot.lane.b32.xlu0 %v177, 4
      %v183 = vpop.permute.xlu0 %182
      %vm186 = vcmask 556064
      %187 = vst.msk [vmem:[#allocation2 + $0x1] sm:$0xff] %vm186, %v181
      %188 = vst.msk [vmem:[#allocation2 + $0x9] sm:$0xff] %vm186, %v183
      %v189 = vld [vmem:[#allocation2] sm:$0xff]
      %v190 = vld [vmem:[#allocation2 + $0x8] sm:$0xff]
      %v191 = vld [vmem:[%s1] sm:$0xff]
      %v192 = vld [vmem:[%s1 + $0x8] sm:$0xff]
      %v193 = vld [vmem:[%s1 + $0x10] sm:$0xff]
      %v194 = vld [vmem:[%s1 + $0x18] sm:$0xff]
      %v195 = vld [vmem:[%s1 + $0x20] sm:$0xff]
      %v196 = vld [vmem:[%s1 + $0x28] sm:$0xff]
      %v197 = vld [vmem:[%s1 + $0x30] sm:$0xff]
      %v198 = vld [vmem:[%s1 + $0x38] sm:$0xff]
      %v199 = vld [vmem:[%s1 + $0x40] sm:$0xff]
      %v200 = vld [vmem:[%s1 + $0x48] sm:$0xff]
      %v201 = vld [vmem:[%s1 + $0x50] sm:$0xff]
      %v202 = vld [vmem:[%s1 + $0x58] sm:$0xff]
      %v203 = vld [vmem:[%s1 + $0x60] sm:$0xff]
      %v204 = vld [vmem:[%s1 + $0x68] sm:$0xff]
      %v205 = vld [vmem:[%s1 + $0x70] sm:$0xff]
      %v206 = vld [vmem:[%s1 + $0x78] sm:$0xff]
      %v207 = vld [vmem:[%s1 + $0x80] sm:$0xff]
      %v208 = vld [vmem:[%s1 + $0x88] sm:$0xff]
      %v209 = vld [vmem:[#allocation2 + $0x1] sm:$0xff]
      %v210 = vld [vmem:[#allocation2 + $0x9] sm:$0xff]
      %s211 = scalar_lea.vmem %s1, 144
      %v212 = vld [vmem:[%s211] sm:$0xff]
      %v213 = vld [vmem:[%s211 + $0x8] sm:$0xff]
      %v214 = vld [vmem:[%s211 + $0x10] sm:$0xff]
      %v215 = vld [vmem:[%s211 + $0x18] sm:$0xff]
      %v216 = vld [vmem:[%s211 + $0x20] sm:$0xff]
      %v217 = vld [vmem:[%s211 + $0x28] sm:$0xff]
      %v218 = vld [vmem:[%s211 + $0x30] sm:$0xff]
      %v219 = vld [vmem:[%s211 + $0x38] sm:$0xff]
      %v220 = vld [vmem:[%s211 + $0x40] sm:$0xff]
      %v221 = vld [vmem:[%s211 + $0x48] sm:$0xff]
      %v222 = vld [vmem:[%s211 + $0x50] sm:$0xff]
      %v223 = vld [vmem:[%s211 + $0x58] sm:$0xff]
      %v224 = vld [vmem:[%s211 + $0x60] sm:$0xff]
      %v225 = vld [vmem:[%s211 + $0x68] sm:$0xff]
      %v226 = vld [vmem:[%s211 + $0x70] sm:$0xff]
      %v227 = vld [vmem:[%s211 + $0x78] sm:$0xff]
      %v228 = vld [vmem:[%s211 + $0x80] sm:$0xff]
      %v229 = vld [vmem:[%s211 + $0x88] sm:$0xff]
      %v231 = vsel %vm171, %v209, 0
      %v234 = vsel %vm171, %v210, 0
      %236 = vmatprep.subr.mxu0 0.0
      %237 = vmatpush1.msra.mxu0 0.0
      %238 = vmatprep.subr.mxu0 0.0
      %239 = vmatpush1.msra.mxu0 0.0
      %240 = vmatprep.subr.mxu0 0.0
      %241 = vmatpush1.msra.mxu0 0.0
      %242 = vmatprep.subr.mxu0 0.0
      %243 = vmatpush1.msra.mxu0 0.0
      %244 = vmatprep.subr.mxu0 0.0
      %245 = vmatpush1.msra.mxu0 0.0
      %246 = vmatprep.subr.mxu0 0.0
      %247 = vmatpush1.msra.mxu0 0.0
      %248 = vmatprep.subr.mxu0 0.0
      %249 = vmatpush1.msra.mxu0 0.0
      %250 = vmatprep.subr.mxu0 %v229
      %251 = vmatpush1.msra.mxu0 %v228
      %252 = vmatprep.subr.mxu0 %v227
      %253 = vmatpush1.msra.mxu0 %v226
      %254 = vmatprep.subr.mxu0 %v225
      %255 = vmatpush1.msra.mxu0 %v224
      %256 = vmatprep.subr.mxu0 %v223
      %257 = vmatpush1.msra.mxu0 %v222
      %258 = vmatprep.subr.mxu0 %v221
      %259 = vmatpush1.msra.mxu0 %v220
      %260 = vmatprep.subr.mxu0 %v219
      %261 = vmatpush1.msra.mxu0 %v218
      %262 = vmatprep.subr.mxu0 %v217
      %263 = vmatpush1.msra.mxu0 %v216
      %264 = vmatprep.subr.mxu0 %v215
      %265 = vmatpush1.msra.mxu0 %v214
      %266 = vmatprep.subr.mxu0 %v213
      %267 = vmatpush1.msra.mxu0 %v212
      %268 = vmatprep.subr.mxu0 0.0
      %269 = vmatpush2.msra.mxu0 0.0
      %270 = vmatprep.subr.mxu0 0.0
      %271 = vmatpush2.msra.mxu0 0.0
      %272 = vmatprep.subr.mxu0 0.0
      %273 = vmatpush2.msra.mxu0 0.0
      %274 = vmatprep.subr.mxu0 0.0
      %275 = vmatpush2.msra.mxu0 0.0
      %276 = vmatprep.subr.mxu0 0.0
      %277 = vmatpush2.msra.mxu0 0.0
      %278 = vmatprep.subr.mxu0 0.0
      %279 = vmatpush2.msra.mxu0 0.0
      %280 = vmatprep.subr.mxu0 0.0
      %281 = vmatpush2.msra.mxu0 0.0
      %282 = vmatprep.subr.mxu0 0.0
      %283 = vmatpush2.msra.mxu0 0.0
      %284 = vmatprep.subr.mxu0 0.0
      %285 = vmatpush2.msra.mxu0 0.0
      %286 = vmatprep.subr.mxu0 0.0
      %287 = vmatpush2.msra.mxu0 0.0
      %288 = vmatprep.subr.mxu0 0.0
      %289 = vmatpush2.msra.mxu0 0.0
      %290 = vmatprep.subr.mxu0 0.0
      %291 = vmatpush2.msra.mxu0 0.0
      %292 = vmatprep.subr.mxu0 0.0
      %293 = vmatpush2.msra.mxu0 0.0
      %294 = vmatprep.subr.mxu0 0.0
      %295 = vmatpush2.msra.mxu0 0.0
      %296 = vmatprep.subr.mxu0 0.0
      %297 = vmatpush2.msra.mxu0 0.0
      %298 = vmatprep.subr.mxu0 0.0
      %299 = vmatpush2.msra.mxu0 0.0
      %300 = vmatprep.mubr.f32.mxu0 0.0
      %301 = vmatmul.mubr.f32.gmra.mxu0 %v231
      %v302 = vpop.f32.mrf.mxu0
      %v303 = vadd.f32 0.0, %v302
      %v304 = vpop.f32.mrf.mxu0
      %v305 = vadd.f32 0.0, %v304
      %306 = vmatprep.mubr.f32.mxu0 0.0
      %307 = vmatmul.mubr.f32.gmra.mxu0 %v234
      %v308 = vpop.f32.mrf.mxu0
      %v309 = vadd.f32 0.0, %v308
      %v310 = vpop.f32.mrf.mxu0
      %v311 = vadd.f32 0.0, %v310
      %312 = vdwg.mxu0
      %v314 = vsel %vm171, %v189, 0
      %v317 = vsel %vm171, %v190, 0
      %319 = vmatprep.subr.mxu0 0.0
      %320 = vmatpush1.msra.mxu0 0.0
      %321 = vmatprep.subr.mxu0 0.0
      %322 = vmatpush1.msra.mxu0 0.0
      %323 = vmatprep.subr.mxu0 0.0
      %324 = vmatpush1.msra.mxu0 0.0
      %325 = vmatprep.subr.mxu0 0.0
      %326 = vmatpush1.msra.mxu0 0.0
      %327 = vmatprep.subr.mxu0 0.0
      %328 = vmatpush1.msra.mxu0 0.0
      %329 = vmatprep.subr.mxu0 0.0
      %330 = vmatpush1.msra.mxu0 0.0
      %331 = vmatprep.subr.mxu0 0.0
      %332 = vmatpush1.msra.mxu0 0.0
      %333 = vmatprep.subr.mxu0 %v208
      %334 = vmatpush1.msra.mxu0 %v207
      %335 = vmatprep.subr.mxu0 %v206
      %336 = vmatpush1.msra.mxu0 %v205
      %337 = vmatprep.subr.mxu0 %v204
      %338 = vmatpush1.msra.mxu0 %v203
      %339 = vmatprep.subr.mxu0 %v202
      %340 = vmatpush1.msra.mxu0 %v201
      %341 = vmatprep.subr.mxu0 %v200
      %342 = vmatpush1.msra.mxu0 %v199
      %343 = vmatprep.subr.mxu0 %v198
      %344 = vmatpush1.msra.mxu0 %v197
      %345 = vmatprep.subr.mxu0 %v196
      %346 = vmatpush1.msra.mxu0 %v195
      %347 = vmatprep.subr.mxu0 %v194
      %348 = vmatpush1.msra.mxu0 %v193
      %349 = vmatprep.subr.mxu0 %v192
      %350 = vmatpush1.msra.mxu0 %v191
      %351 = vmatprep.subr.mxu0 0.0
      %352 = vmatpush2.msra.mxu0 0.0
      %353 = vmatprep.subr.mxu0 0.0
      %354 = vmatpush2.msra.mxu0 0.0
      %355 = vmatprep.subr.mxu0 0.0
      %356 = vmatpush2.msra.mxu0 0.0
      %357 = vmatprep.subr.mxu0 0.0
      %358 = vmatpush2.msra.mxu0 0.0
      %359 = vmatprep.subr.mxu0 0.0
      %360 = vmatpush2.msra.mxu0 0.0
      %361 = vmatprep.subr.mxu0 0.0
      %362 = vmatpush2.msra.mxu0 0.0
      %363 = vmatprep.subr.mxu0 0.0
      %364 = vmatpush2.msra.mxu0 0.0
      %365 = vmatprep.subr.mxu0 0.0
      %366 = vmatpush2.msra.mxu0 0.0
      %367 = vmatprep.subr.mxu0 0.0
      %368 = vmatpush2.msra.mxu0 0.0
      %369 = vmatprep.subr.mxu0 0.0
      %370 = vmatpush2.msra.mxu0 0.0
      %371 = vmatprep.subr.mxu0 0.0
      %372 = vmatpush2.msra.mxu0 0.0
      %373 = vmatprep.subr.mxu0 0.0
      %374 = vmatpush2.msra.mxu0 0.0
      %375 = vmatprep.subr.mxu0 0.0
      %376 = vmatpush2.msra.mxu0 0.0
      %377 = vmatprep.subr.mxu0 0.0
      %378 = vmatpush2.msra.mxu0 0.0
      %379 = vmatprep.subr.mxu0 0.0
      %380 = vmatpush2.msra.mxu0 0.0
      %381 = vmatprep.subr.mxu0 0.0
      %382 = vmatpush2.msra.mxu0 0.0
      %383 = vmatprep.mubr.f32.mxu0 0.0
      %384 = vmatmul.mubr.f32.gmra.mxu0 %v314
      %v385 = vpop.f32.mrf.mxu0
      %v386 = vadd.f32 %v303, %v385
      %v387 = vpop.f32.mrf.mxu0
      %v388 = vadd.f32 %v305, %v387
      %389 = vmatprep.mubr.f32.mxu0 0.0
      %390 = vmatmul.mubr.f32.gmra.mxu0 %v317
      %v391 = vpop.f32.mrf.mxu0
      %v392 = vadd.f32 %v309, %v391
      %v393 = vpop.f32.mrf.mxu0
      %v394 = vadd.f32 %v311, %v393
      %395 = vdwg.mxu0
      %v396 = vld [vmem:[#allocation2 + $0x2] sm:$0xff]
      %v397 = vld [vmem:[#allocation2 + $0xa] sm:$0xff]
      %s398 = scalar_lea.vmem %s1, 288
      %v399 = vld [vmem:[%s398] sm:$0xff]
      %v400 = vld [vmem:[%s398 + $0x8] sm:$0xff]
      %v401 = vld [vmem:[%s398 + $0x10] sm:$0xff]
      %v402 = vld [vmem:[%s398 + $0x18] sm:$0xff]
      %v403 = vld [vmem:[%s398 + $0x20] sm:$0xff]
      %v404 = vld [vmem:[%s398 + $0x28] sm:$0xff]
      %v405 = vld [vmem:[%s398 + $0x30] sm:$0xff]
      %v406 = vld [vmem:[%s398 + $0x38] sm:$0xff]
      %v407 = vld [vmem:[%s398 + $0x40] sm:$0xff]
      %v408 = vld [vmem:[%s398 + $0x48] sm:$0xff]
      %v409 = vld [vmem:[%s398 + $0x50] sm:$0xff]
      %v410 = vld [vmem:[%s398 + $0x58] sm:$0xff]
      %v411 = vld [vmem:[%s398 + $0x60] sm:$0xff]
      %v412 = vld [vmem:[%s398 + $0x68] sm:$0xff]
      %v413 = vld [vmem:[%s398 + $0x70] sm:$0xff]
      %v414 = vld [vmem:[%s398 + $0x78] sm:$0xff]
      %v415 = vld [vmem:[%s398 + $0x80] sm:$0xff]
      %v416 = vld [vmem:[%s398 + $0x88] sm:$0xff]
      %v418 = vsel %vm171, %v396, 0
      %v421 = vsel %vm171, %v397, 0
      %423 = vmatprep.subr.mxu0 0.0
      %424 = vmatpush1.msra.mxu0 0.0
      %425 = vmatprep.subr.mxu0 0.0
      %426 = vmatpush1.msra.mxu0 0.0
      %427 = vmatprep.subr.mxu0 0.0
      %428 = vmatpush1.msra.mxu0 0.0
      %429 = vmatprep.subr.mxu0 0.0
      %430 = vmatpush1.msra.mxu0 0.0
      %431 = vmatprep.subr.mxu0 0.0
      %432 = vmatpush1.msra.mxu0 0.0
      %433 = vmatprep.subr.mxu0 0.0
      %434 = vmatpush1.msra.mxu0 0.0
      %435 = vmatprep.subr.mxu0 0.0
      %436 = vmatpush1.msra.mxu0 0.0
      %437 = vmatprep.subr.mxu0 %v416
      %438 = vmatpush1.msra.mxu0 %v415
      %439 = vmatprep.subr.mxu0 %v414
      %440 = vmatpush1.msra.mxu0 %v413
      %441 = vmatprep.subr.mxu0 %v412
      %442 = vmatpush1.msra.mxu0 %v411
      %443 = vmatprep.subr.mxu0 %v410
      %444 = vmatpush1.msra.mxu0 %v409
      %445 = vmatprep.subr.mxu0 %v408
      %446 = vmatpush1.msra.mxu0 %v407
      %447 = vmatprep.subr.mxu0 %v406
      %448 = vmatpush1.msra.mxu0 %v405
      %449 = vmatprep.subr.mxu0 %v404
      %450 = vmatpush1.msra.mxu0 %v403
      %451 = vmatprep.subr.mxu0 %v402
      %452 = vmatpush1.msra.mxu0 %v401
      %453 = vmatprep.subr.mxu0 %v400
      %454 = vmatpush1.msra.mxu0 %v399
      %455 = vmatprep.subr.mxu0 0.0
      %456 = vmatpush2.msra.mxu0 0.0
      %457 = vmatprep.subr.mxu0 0.0
      %458 = vmatpush2.msra.mxu0 0.0
      %459 = vmatprep.subr.mxu0 0.0
      %460 = vmatpush2.msra.mxu0 0.0
      %461 = vmatprep.subr.mxu0 0.0
      %462 = vmatpush2.msra.mxu0 0.0
      %463 = vmatprep.subr.mxu0 0.0
      %464 = vmatpush2.msra.mxu0 0.0
      %465 = vmatprep.subr.mxu0 0.0
      %466 = vmatpush2.msra.mxu0 0.0
      %467 = vmatprep.subr.mxu0 0.0
      %468 = vmatpush2.msra.mxu0 0.0
      %469 = vmatprep.subr.mxu0 0.0
      %470 = vmatpush2.msra.mxu0 0.0
      %471 = vmatprep.subr.mxu0 0.0
      %472 = vmatpush2.msra.mxu0 0.0
      %473 = vmatprep.subr.mxu0 0.0
      %474 = vmatpush2.msra.mxu0 0.0
      %475 = vmatprep.subr.mxu0 0.0
      %476 = vmatpush2.msra.mxu0 0.0
      %477 = vmatprep.subr.mxu0 0.0
      %478 = vmatpush2.msra.mxu0 0.0
      %479 = vmatprep.subr.mxu0 0.0
      %480 = vmatpush2.msra.mxu0 0.0
      %481 = vmatprep.subr.mxu0 0.0
      %482 = vmatpush2.msra.mxu0 0.0
      %483 = vmatprep.subr.mxu0 0.0
      %484 = vmatpush2.msra.mxu0 0.0
      %485 = vmatprep.subr.mxu0 0.0
      %486 = vmatpush2.msra.mxu0 0.0
      %487 = vmatprep.mubr.f32.mxu0 0.0
      %488 = vmatmul.mubr.f32.gmra.mxu0 %v418
      %v489 = vpop.f32.mrf.mxu0
      %v490 = vadd.f32 0.0, %v489
      %v491 = vpop.f32.mrf.mxu0
      %v492 = vadd.f32 0.0, %v491
      %493 = vmatprep.mubr.f32.mxu0 0.0
      %494 = vmatmul.mubr.f32.gmra.mxu0 %v421
      %v495 = vpop.f32.mrf.mxu0
      %v496 = vadd.f32 0.0, %v495
      %v497 = vpop.f32.mrf.mxu0
      %v498 = vadd.f32 0.0, %v497
      %499 = vdwg.mxu0
      %v500 = vadd.f32 %v386, %v490
      %v501 = vadd.f32 %v388, %v492
      %v502 = vadd.f32 %v392, %v496
      %v503 = vadd.f32 %v394, %v498
      %v504 = vld [vmem:[%s2] sm:$0x3]
      %v506 = vlaneseq
      %v507 = vshrl.u32 %v506, 7
      %v508 = vsub.s32 0, %v507
      %v509 = vrot.slane %v504, %v508
      %v510 = vlaneseq
      %v511 = vshrl.u32 %v510, 7
      %v512 = vsub.s32 1, %v511
      %v513 = vrot.slane %v504, %v512
      %v516 = vadd.f32 %v500, %v509
      %v517 = vadd.f32 %v501, %v513
      %v518 = vadd.f32 %v502, %v509
      %v519 = vadd.f32 %v503, %v513
      %v520 = vmax.f32 %v516, 0.0
      %v521 = vmax.f32 %v517, 0.0
      %v522 = vmax.f32 %v518, 0.0
      %v523 = vmax.f32 %v519, 0.0
      %524 = vst [vmem:[%s170] sm:$0xff] %v520
      %525 = vst [vmem:[%s170 + $0x8] sm:$0xff] %v521
      %526 = vst [vmem:[%s170 + $0x10] sm:$0xff] %v522
      %527 = vst [vmem:[%s170 + $0x18] sm:$0xff] %v523
      %p528 = scmp.lt.s32.totalorder %s14, 1
      %s529 = scalar_select %p528, %s14, 1
      %s530 = smul.addr %s529, 4
      %s531 = smul.addr %s530, 8
      %s532 = scalar_lea.vmem %s3, %s531
      // Predicated region
      $region33: #{upsampler_forward.1} parent=31 // pred_check
        %p533 = pneg %p100
      $region34: #{upsampler_forward.1} parent=31 // pred_check_branch
        %535 = sbr.rel (%p533) target = $region36
      $region35: #{upsampler_forward.1} parent=31 // pred_region
        _
      $region36: #{upsampler_forward.1} parent=31 // pred_fallthru
        _
    $region32: #{upsampler_forward.1} parent=5 // pred_fallthru
      _
    %p536 = scmp.le.s32.totalorder 2, %s9
    // Predicated region
    $region37: #{upsampler_forward.1} parent=5 // pred_check
      %p537 = pneg %p536
    $region38: #{upsampler_forward.1} parent=5 // pred_check_branch
      %539 = sbr.rel (%p537) target = $region40
    $region39: #{upsampler_forward.1} parent=5 // pred_region
      %s540 = ssub.s32 %s9, 2
      // Predicated region
      $region41: #{upsampler_forward.1} parent=39 // pred_check
        %p541 = pneg %p106
      $region42: #{upsampler_forward.1} parent=39 // pred_check_branch
        %543 = sbr.rel (%p541) target = $region44
      $region43: #{upsampler_forward.1} parent=39 // pred_region
        %p544 = scmp.lt.s32.totalorder %s15, 1
        %s545 = scalar_select %p544, %s15, 1
        %s546 = smul.addr %s545, 4
        %s547 = smul.addr %s546, 8
        %s548 = scalar_lea.vmem %s3, %s547
      $region44: #{upsampler_forward.1} parent=39 // pred_fallthru
        _
    $region40: #{upsampler_forward.1} parent=5 // pred_fallthru
      _
  $region6: #{upsampler_forward.1} parent=0 // loop_footer
    %s13 = sadd.s32 1, %s9
  $region7: #{upsampler_forward.1} parent=0 // loop_footer_branch
    %8 = sbr.rel target = $region3
  $region8: #{upsampler_forward.1} parent=0 // loop_exit
    _

</llo_original>
